<compile_context>
chip_gen: v7x
topology: tpu7x:2x2x1
jax: 0.10.0
libtpu: 0.0.40
codegen_flags: <defaults>
</compile_context>

<pallas_src>
import itertools

import jax
import jax.numpy as jnp
from jax.experimental import pallas as pl
from jax.experimental.pallas import tpu as pltpu

# ---- model hyper-parameters (small, consistent with an inverted-pendulum policy) ----
NB_LAYERS = 3          # policy.nb_layers
STATE_DIM = 4          # pendulum state: [x, x_dot, theta, theta_dot]
WIDTH = 32             # policy.width
ACTION_DIM = 1         # scalar torque

GRID_FREE_MAX_ROWS = 4096   # single-invocation (grid-free) path up to this batch size
BATCH_TILE = 2048           # rows (lanes) per grid step above that


def _round_up(n, m):
    return ((n + m - 1) // m) * m


# ----------------------------------------------------------------------------------
# Pallas kernel: full MLP forward, batch-on-lanes, state-norm folded into layer 0.
#   x_ref : (max_dim, Bt) f32   activations^T; rows >= true state_dim are zero
#   w_ref : (L, max_dim, max_dim) f32   each layer zero-padded to a square tile
#   b_ref : (L, max_dim, 1) f32         zero-padded biases
#   o_ref : (max_dim, Bt) f32           rows >= action_dim are zero
# Zero-padded weight columns/rows and zero biases make the padding exactly inert.
# ----------------------------------------------------------------------------------
def _make_mlp_kernel(n_layers):
    def kernel(x_ref, w_ref, b_ref, o_ref):
        h = x_ref[...]                                            # (max_dim, Bt) f32
        for i in range(n_layers):
            h = jnp.dot(w_ref[i], h,
                        preferred_element_type=jnp.float32)       # MXU, N = batch lanes
            h = h + b_ref[i]                                      # (max_dim,1) lane-broadcast
            if i < n_layers - 1:
                h = jnp.maximum(h, 0.0)                           # ReLU on all but last layer
        o_ref[...] = h                                            # lane-dense unmasked store

    return kernel


# ----------------------------------------------------------------------------------
# One-time parameter preparation (hoisted out of the forward hot path).
# ----------------------------------------------------------------------------------
def prepare_params(mean, std, Ws, bs):
    """Fold state_norm into layer 0, zero-pad every layer to one uniform
    (max_dim, max_dim) tile and pack all weights / biases into two f32 buffers."""
    mean = jnp.asarray(mean, jnp.float32)
    inv_std = 1.0 / jnp.asarray(std, jnp.float32)
    Ws = [jnp.asarray(W, jnp.float32) for W in Ws]       # native (out_i, in_i)
    bs = [jnp.asarray(b, jnp.float32) for b in bs]

    # y0 = W0 @ ((x - mean) * inv_std) + b0
    #    = (W0 * inv_std[None, :]) @ x + (b0 - W0 @ (mean * inv_std))
    bs[0] = bs[0] - Ws[0] @ (mean * inv_std)
    Ws[0] = Ws[0] * inv_std[None, :]

    max_dim = max(max(W.shape) for W in Ws)
    L = len(Ws)
    W_all = jnp.zeros((L, max_dim, max_dim), jnp.float32)
    b_all = jnp.zeros((L, max_dim, 1), jnp.float32)
    for i, (W, b) in enumerate(zip(Ws, bs)):
        W_all = W_all.at[i, :W.shape[0], :W.shape[1]].set(W)
        b_all = b_all.at[i, :b.shape[0], 0].set(b)
    return W_all, b_all, max_dim


# ----------------------------------------------------------------------------------
# Forward wrapper: only `x` is touched per call.
# ----------------------------------------------------------------------------------
def networkcopy_forward(x, W_all, b_all, *, action_dim=ACTION_DIM, state_dim=STATE_DIM,
                        grid_free_max_rows=GRID_FREE_MAX_ROWS, batch_tile=BATCH_TILE):
    x = jnp.asarray(x, jnp.float32)
    B = x.shape[0]
    n_layers, max_dim, _ = W_all.shape
    kernel = _make_mlp_kernel(n_layers)

    # Batch-on-lanes: transpose once outside the kernel; pad the feature axis to
    # max_dim (inert, weight cols are zero there) and the batch/lane axis to a
    # multiple of 128 so every load/store inside the kernel is lane-dense.
    xT = x.T                                                     # (state_dim, B)
    if B <= grid_free_max_rows:
        Bp = max(_round_up(B, 128), 128)
        lane_tile = Bp
        use_grid = False
    else:
        Bp = _round_up(B, batch_tile)
        lane_tile = batch_tile
        use_grid = True
    xT = jnp.pad(xT, ((0, max_dim - state_dim), (0, Bp - B)))    # zeros -> inert

    if not use_grid:
        # Single grid-free invocation: every operand is one full-array VMEM block.
        out = pl.pallas_call(
            kernel,
            out_shape=jax.ShapeDtypeStruct((max_dim, Bp), jnp.float32),
        )(xT, W_all, b_all)
    else:
        # Very large batches: tile the lane (batch) axis; packed weights/biases stay
        # at block (0,0,0) resident across the grid.  "parallel" lets v7x shard the
        # grid across both TensorCores (>= 2048 rows per step, well over the ~0.35us
        # per-step overhead).
        out = pl.pallas_call(
            kernel,
            out_shape=jax.ShapeDtypeStruct((max_dim, Bp), jnp.float32),
            grid=(Bp // lane_tile,),
            in_specs=[
                pl.BlockSpec((max_dim, lane_tile), lambda i: (0, i)),
                pl.BlockSpec(W_all.shape, lambda i: (0, 0, 0)),
                pl.BlockSpec(b_all.shape, lambda i: (0, 0, 0)),
            ],
            out_specs=pl.BlockSpec((max_dim, lane_tile), lambda i: (0, i)),
            compiler_params=pltpu.CompilerParams(
                dimension_semantics=("parallel",)),
        )(xT, W_all, b_all)

    # Rows [0, action_dim) of the transposed output are the real action dims; the
    # padded batch lanes are sliced off here (zero-padded inputs never leak out).
    return out[:action_dim, :B].T


# ----------------------------------------------------------------------------------
# Parameter setup (plain JAX): replicates NetworkCopy.setup() bias folding.
# ----------------------------------------------------------------------------------
def state_norm(x, mean, std):
    return (x - mean) / std


def compute_adjusted_biases(Ws, bs, vertices_norm):
    """Folds the 'extra bias' computed on the normalized buffer vertices into the
    layer biases, exactly as NetworkCopy.setup() does."""
    x = vertices_norm
    n_v = x.shape[0]
    new_bs = []
    for W, b in zip(Ws, bs):
        h = x @ W.T + b
        agreement = h > 0
        invalid = jnp.logical_and(
            jnp.logical_not(jnp.all(agreement, axis=0)), jnp.any(agreement, axis=0))
        sign = jnp.sign(
            jnp.sum(agreement.astype(jnp.float32), axis=0) - (n_v / 2.0 + 0.001))
        extra = jnp.minimum(jnp.min(h * sign - 0.0001, axis=0), 0.0) * sign
        extra = jnp.where(invalid, extra, 0.0)
        b_new = b - extra
        h = h - extra
        x = jnp.maximum(h, 0.0)
        new_bs.append(b_new)
    return new_bs


# ----------------------------------------------------------------------------------
# Pure-JAX reference for verification (faithful f32 model of NetworkCopy.forward).
# ----------------------------------------------------------------------------------
def reference_forward(x, mean, std, Ws, bs):
    h = state_norm(jnp.asarray(x, jnp.float32), mean, std)
    for i in range(len(Ws) - 1):
        h = jnp.maximum(
            jnp.dot(h, Ws[i].T, precision=jax.lax.Precision.HIGHEST) + bs[i], 0.0)
    return jnp.dot(h, Ws[-1].T, precision=jax.lax.Precision.HIGHEST) + bs[-1]


if __name__ == "__main__":
    key = jax.random.PRNGKey(0)
    keys = jax.random.split(key, 2 * NB_LAYERS + 4)

    # Deterministic "running" normalizer parameters (state_norm).
    norm_mean = 0.1 * jax.random.normal(keys[0], (STATE_DIM,), jnp.float32)
    norm_std = 0.5 + jax.random.uniform(keys[1], (STATE_DIM,), jnp.float32)

    # buffer_vertices: the 2^4 corners of the box [-1, 1]^4, then normalized.
    buffer_vertices = jnp.array(
        list(itertools.product([-1.0, 1.0], repeat=STATE_DIM)), dtype=jnp.float32)
    vertices_norm = state_norm(buffer_vertices, norm_mean, norm_std)

    # Deterministic policy layer parameters (PyTorch Linear-style uniform init).
    dims = [STATE_DIM] + [WIDTH] * (NB_LAYERS - 1) + [ACTION_DIM]
    Ws, bs = [], []
    for i in range(NB_LAYERS):
        fan_in, fan_out = dims[i], dims[i + 1]
        bound = 1.0 / jnp.sqrt(jnp.float32(fan_in))
        Ws.append(jax.random.uniform(
            keys[2 + 2 * i], (fan_out, fan_in), jnp.float32, -bound, bound))
        bs.append(jax.random.uniform(
            keys[3 + 2 * i], (fan_out,), jnp.float32, -bound, bound))

    # NetworkCopy.setup(): fold the extra bias into the layer biases (plain JAX).
    bs_adj = compute_adjusted_biases(Ws, bs, vertices_norm)

    # One-time kernel parameter prep (norm folding, padding, packing). f32 throughout.
    W_all, b_all, max_dim = prepare_params(norm_mean, norm_std, Ws, bs_adj)

    # --- small batch: grid-free single invocation -----------------------------------
    BATCH_SMALL = 8
    x_small = jax.random.normal(keys[-2], (BATCH_SMALL, STATE_DIM), jnp.float32)
    out_small = jax.block_until_ready(networkcopy_forward(x_small, W_all, b_all))
    ref_small = reference_forward(x_small, norm_mean, norm_std, Ws, bs_adj)
    assert out_small.shape == (BATCH_SMALL, ACTION_DIM)
    assert bool(jnp.allclose(out_small, ref_small, rtol=2e-2, atol=2e-2)), (
        float(jnp.max(jnp.abs(out_small - ref_small))))

    # --- larger batch: exercise the 1-D batch grid path with small test tiles -------
    # (thresholds lowered just to cover the gridded code path; production defaults
    #  keep batches up to 4096 rows grid-free and use 2048-row tiles above that)
    BATCH_BIG = 512
    x_big = jax.random.normal(keys[-1], (BATCH_BIG, STATE_DIM), jnp.float32)
    out_big = jax.block_until_ready(
        networkcopy_forward(x_big, W_all, b_all,
                            grid_free_max_rows=128, batch_tile=256))
    ref_big = reference_forward(x_big, norm_mean, norm_std, Ws, bs_adj)
    assert out_big.shape == (BATCH_BIG, ACTION_DIM)
    assert bool(jnp.allclose(out_big, ref_big, rtol=2e-2, atol=2e-2)), (
        float(jnp.max(jnp.abs(out_big - ref_big))))

    print("KERNEL_OK")
</pallas_src>

<mosaic_0001>
module attributes {stable_mosaic.version = 11 : i64} {
  func.func @kernel(%arg0: memref<32x128xf32, #tpu.memory_space<vmem>>, %arg1: memref<3x32x32xf32, #tpu.memory_space<vmem>>, %arg2: memref<3x32x1xf32, #tpu.memory_space<vmem>>, %arg3: memref<32x128xf32, #tpu.memory_space<vmem>>) attributes {dimension_semantics = [], scalar_prefetch = 0 : i64, scratch_operands = 0 : i64, tpu.core_type = #tpu.core_type<tc>} {
    %c0 = arith.constant 0 : index
    %c0_0 = arith.constant 0 : index
    %0 = vector.load %arg0[%c0, %c0_0] : memref<32x128xf32, #tpu.memory_space<vmem>>, vector<32x128xf32>
    %c0_1 = arith.constant 0 : index
    %c0_2 = arith.constant 0 : index
    %c0_3 = arith.constant 0 : index
    %1 = vector.load %arg1[%c0_1, %c0_2, %c0_3] : memref<3x32x32xf32, #tpu.memory_space<vmem>>, vector<1x32x32xf32>
    %2 = vector.shape_cast %1 : vector<1x32x32xf32> to vector<32x32xf32>
    %cst = arith.constant dense<0.000000e+00> : vector<32x128xf32>
    %3 = tpu.matmul %2, %0, %cst {dimension_numbers = #tpu.dot_dimension_numbers<[1], [0], [0], [1], [0, 0, 1, 1], [], []>} : vector<32x32xf32>, vector<32x128xf32>, vector<32x128xf32> -> vector<32x128xf32>
    %c0_4 = arith.constant 0 : index
    %c0_5 = arith.constant 0 : index
    %c0_6 = arith.constant 0 : index
    %4 = vector.load %arg2[%c0_4, %c0_5, %c0_6] : memref<3x32x1xf32, #tpu.memory_space<vmem>>, vector<1x32x1xf32>
    %5 = vector.shape_cast %4 : vector<1x32x1xf32> to vector<32x1xf32>
    %6 = vector.broadcast %5 : vector<32x1xf32> to vector<32x128xf32>
    %7 = arith.addf %3, %6 : vector<32x128xf32>
    %cst_7 = arith.constant 0.000000e+00 : f32
    %8 = vector.broadcast %cst_7 : f32 to vector<32x128xf32>
    %9 = arith.maximumf %7, %8 : vector<32x128xf32>
    %c1 = arith.constant 1 : index
    %c0_8 = arith.constant 0 : index
    %c0_9 = arith.constant 0 : index
    %10 = vector.load %arg1[%c1, %c0_8, %c0_9] : memref<3x32x32xf32, #tpu.memory_space<vmem>>, vector<1x32x32xf32>
    %11 = vector.shape_cast %10 : vector<1x32x32xf32> to vector<32x32xf32>
    %cst_10 = arith.constant dense<0.000000e+00> : vector<32x128xf32>
    %12 = tpu.matmul %11, %9, %cst_10 {dimension_numbers = #tpu.dot_dimension_numbers<[1], [0], [0], [1], [0, 0, 1, 1], [], []>} : vector<32x32xf32>, vector<32x128xf32>, vector<32x128xf32> -> vector<32x128xf32>
    %c1_11 = arith.constant 1 : index
    %c0_12 = arith.constant 0 : index
    %c0_13 = arith.constant 0 : index
    %13 = vector.load %arg2[%c1_11, %c0_12, %c0_13] : memref<3x32x1xf32, #tpu.memory_space<vmem>>, vector<1x32x1xf32>
    %14 = vector.shape_cast %13 : vector<1x32x1xf32> to vector<32x1xf32>
    %15 = vector.broadcast %14 : vector<32x1xf32> to vector<32x128xf32>
    %16 = arith.addf %12, %15 : vector<32x128xf32>
    %cst_14 = arith.constant 0.000000e+00 : f32
    %17 = vector.broadcast %cst_14 : f32 to vector<32x128xf32>
    %18 = arith.maximumf %16, %17 : vector<32x128xf32>
    %c2 = arith.constant 2 : index
    %c0_15 = arith.constant 0 : index
    %c0_16 = arith.constant 0 : index
    %19 = vector.load %arg1[%c2, %c0_15, %c0_16] : memref<3x32x32xf32, #tpu.memory_space<vmem>>, vector<1x32x32xf32>
    %20 = vector.shape_cast %19 : vector<1x32x32xf32> to vector<32x32xf32>
    %cst_17 = arith.constant dense<0.000000e+00> : vector<32x128xf32>
    %21 = tpu.matmul %20, %18, %cst_17 {dimension_numbers = #tpu.dot_dimension_numbers<[1], [0], [0], [1], [0, 0, 1, 1], [], []>} : vector<32x32xf32>, vector<32x128xf32>, vector<32x128xf32> -> vector<32x128xf32>
    %c2_18 = arith.constant 2 : index
    %c0_19 = arith.constant 0 : index
    %c0_20 = arith.constant 0 : index
    %22 = vector.load %arg2[%c2_18, %c0_19, %c0_20] : memref<3x32x1xf32, #tpu.memory_space<vmem>>, vector<1x32x1xf32>
    %23 = vector.shape_cast %22 : vector<1x32x1xf32> to vector<32x1xf32>
    %24 = vector.broadcast %23 : vector<32x1xf32> to vector<32x128xf32>
    %25 = arith.addf %21, %24 : vector<32x128xf32>
    %c0_21 = arith.constant 0 : index
    %c0_22 = arith.constant 0 : index
    %26 = vector.load %arg3[%c0_21, %c0_22] : memref<32x128xf32, #tpu.memory_space<vmem>>, vector<32x128xf32>
    tpu.vector_store %arg3[%c0_21, %c0_22], %25 {strides = array<i32>} : memref<32x128xf32, #tpu.memory_space<vmem>>, vector<32x128xf32>,
    return
  }
}

</mosaic_0001>

<llo_original>
// kernel: tpu_custom_call.1
$region0: #{tpu_custom_call.1}
  #allocation0 [shape = 'u32[]', space=smem, size = 0x4, offset = 0x4, fixed_abs, tag = 'smem constant byte address 0x4 - core index']
  #allocation1 [shape = 'u32[144,128]{1,0:T(1,128)}', space=vmem, size = 0x12000, scoped, tag = 'internal scratch']
  %s0 = inlined_call_operand.hbm [shape: f32[32,128], index: 0, kind: input, shape index: {}]
  %s1 = inlined_call_operand.vmem [shape: f32[3,32,32], index: 1, kind: input, shape index: {}]
  %s2 = inlined_call_operand.vmem [shape: f32[3,32,1], index: 2, kind: input, shape index: {}]
  %s3 = inlined_call_operand.hbm [shape: f32[32,128], index: 3, kind: output, shape index: {}]
  %s4 = sld [smem:[#allocation0]]
  $region26: #{tpu_custom_call.1} parent=0
    _
  %s6 = ssub.s32 1, %s4
  %s7 = scalar_select 0, %s6, %s4
  $region1: #{tpu_custom_call.1} parent=0
    #allocation2 [shape = 'u8[16384]{0}', space=vmem, size = 0x4000, scoped, tag = 'input window, operand 0, single buffered']
    #allocation3 [shape = 's32[1]{0}', space=sflag, size = 0x4, scoped, tag = 'scoped memory for tpu_custom_call.1']
    #allocation4 [shape = 's32[1]{0}', space=sflag, size = 0x4, scoped, tag = 'scoped memory for tpu_custom_call.1']
    #allocation5 [shape = 'u8[16384]{0}', space=vmem, size = 0x4000, scoped, tag = 'output window, operand 0, single buffered']
    %8 = vsyncpa [#allocation3], 0
    %9 = vsyncpa [#allocation4], 0
    // Predicated region
    $region2: #{tpu_custom_call.1} parent=1 // pred_check
      _
    $region3: #{tpu_custom_call.1} parent=1 // pred_check_branch
      %11 = sbr.rel (0) target = $region5
    $region4: #{tpu_custom_call.1} parent=1 // pred_region
      %s13 = ssub.s32 512, 512
      %14 = vsyncadd [#allocation3], %s13
      %s15 = sshll.u32 [#allocation2], 4
      %s16 = int_to_ptr.vmem [resolvable:$true] %s15
      %21 = dma.hbm_to_vmem [thread:$0]  %s0, 512, %s16, [#allocation3], 128, 128, 8
    $region5: #{tpu_custom_call.1} parent=1 // pred_fallthru
      _
    // Predicated region
    $region6: #{tpu_custom_call.1} parent=1 // pred_check
      _
    $region7: #{tpu_custom_call.1} parent=1 // pred_check_branch
      %23 = sbr.rel (0) target = $region9
    $region8: #{tpu_custom_call.1} parent=1 // pred_region
      _
    $region9: #{tpu_custom_call.1} parent=1 // pred_fallthru
      _
    // Predicated region
    $region10: #{tpu_custom_call.1} parent=1 // pred_check
      _
    $region11: #{tpu_custom_call.1} parent=1 // pred_check_branch
      %25 = sbr.rel (0) target = $region13
    $region12: #{tpu_custom_call.1} parent=1 // pred_region
      _
    $region13: #{tpu_custom_call.1} parent=1 // pred_fallthru
      _
    // Predicated region
    $region14: #{tpu_custom_call.1} parent=1 // pred_check
      _
    $region15: #{tpu_custom_call.1} parent=1 // pred_check_branch
      %27 = sbr.rel (0) target = $region17
    $region16: #{tpu_custom_call.1} parent=1 // pred_region
      %28 = dma.done [#allocation3], 512
    $region17: #{tpu_custom_call.1} parent=1 // pred_fallthru
      _
    %v29 = vld [vmem:[#allocation2] sm:$0xff]
    %v30 = vld [vmem:[#allocation2 + $0x8] sm:$0xff]
    %v31 = vld [vmem:[#allocation2 + $0x10] sm:$0xff]
    %v32 = vld [vmem:[#allocation2 + $0x18] sm:$0xff]
    %v33 = vld [vmem:[%s1] sm:$0xff]
    %v34 = vld [vmem:[%s1 + $0x8] sm:$0xff]
    %v35 = vld [vmem:[%s1 + $0x10] sm:$0xff]
    %v36 = vld [vmem:[%s1 + $0x18] sm:$0xff]
    %v37 = vld [vmem:[%s2] sm:$0xff]
    %v38 = vld [vmem:[%s2 + $0x8] sm:$0xff]
    %v39 = vld [vmem:[%s2 + $0x10] sm:$0xff]
    %v40 = vld [vmem:[%s2 + $0x18] sm:$0xff]
    %42 = vset.pattern.permute.xlu0 0
    %43 = vperm.xlu0 %42, %v37
    %v44 = vpop.permute.xlu0 %43
    %47 = vset.pattern.permute.xlu0 0
    %48 = vperm.xlu0 %47, %v38
    %v49 = vpop.permute.xlu0 %48
    %52 = vset.pattern.permute.xlu0 0
    %53 = vperm.xlu0 %52, %v39
    %v54 = vpop.permute.xlu0 %53
    %57 = vset.pattern.permute.xlu0 0
    %58 = vperm.xlu0 %57, %v40
    %v59 = vpop.permute.xlu0 %58
    %vm61 = vcmask 261120
    %v63 = vsel %vm61, %v33, 0
    %v66 = vsel %vm61, %v34, 0
    %v69 = vsel %vm61, %v35, 0
    %v72 = vsel %vm61, %v36, 0
    %74 = vmatprep.subr.mxu0 0.0
    %75 = vmatpush1.msra.mxu0 %v29
    %76 = vmatprep.subr.mxu0 0.0
    %77 = vmatpush1.msra.mxu0 %v30
    %78 = vmatprep.subr.mxu0 0.0
    %79 = vmatpush1.msra.mxu0 %v31
    %80 = vmatprep.subr.mxu0 0.0
    %81 = vmatpush1.msra.mxu0 %v32
    %82 = vmatprep.subr.mxu0 0.0
    %83 = vmatpush1.msra.mxu0 0.0
    %84 = vmatprep.subr.mxu0 0.0
    %85 = vmatpush1.msra.mxu0 0.0
    %86 = vmatprep.subr.mxu0 0.0
    %87 = vmatpush1.msra.mxu0 0.0
    %88 = vmatprep.subr.mxu0 0.0
    %89 = vmatpush1.msra.mxu0 0.0
    %90 = vmatprep.subr.mxu0 0.0
    %91 = vmatpush1.msra.mxu0 0.0
    %92 = vmatprep.subr.mxu0 0.0
    %93 = vmatpush1.msra.mxu0 0.0
    %94 = vmatprep.subr.mxu0 0.0
    %95 = vmatpush1.msra.mxu0 0.0
    %96 = vmatprep.subr.mxu0 0.0
    %97 = vmatpush1.msra.mxu0 0.0
    %98 = vmatprep.subr.mxu0 0.0
    %99 = vmatpush1.msra.mxu0 0.0
    %100 = vmatprep.subr.mxu0 0.0
    %101 = vmatpush1.msra.mxu0 0.0
    %102 = vmatprep.subr.mxu0 0.0
    %103 = vmatpush1.msra.mxu0 0.0
    %104 = vmatprep.subr.mxu0 0.0
    %105 = vmatpush1.msra.mxu0 0.0
    %106 = vmatprep.subr.mxu0 0.0
    %107 = vmatpush1.msra.mxu0 0.0
    %108 = vmatprep.subr.mxu0 0.0
    %109 = vmatpush1.msra.mxu0 0.0
    %110 = vmatprep.subr.mxu0 0.0
    %111 = vmatpush1.msra.mxu0 0.0
    %112 = vmatprep.subr.mxu0 0.0
    %113 = vmatpush1.msra.mxu0 0.0
    %114 = vmatprep.subr.mxu0 0.0
    %115 = vmatpush1.msra.mxu0 0.0
    %116 = vmatprep.subr.mxu0 0.0
    %117 = vmatpush1.msra.mxu0 0.0
    %118 = vmatprep.subr.mxu0 0.0
    %119 = vmatpush1.msra.mxu0 0.0
    %120 = vmatprep.subr.mxu0 0.0
    %121 = vmatpush1.msra.mxu0 0.0
    %122 = vmatprep.subr.mxu0 0.0
    %123 = vmatpush1.msra.mxu0 0.0
    %124 = vmatprep.subr.mxu0 0.0
    %125 = vmatpush1.msra.mxu0 0.0
    %126 = vmatprep.subr.mxu0 0.0
    %127 = vmatpush1.msra.mxu0 0.0
    %128 = vmatprep.subr.mxu0 0.0
    %129 = vmatpush1.msra.mxu0 0.0
    %130 = vmatprep.subr.mxu0 0.0
    %131 = vmatpush1.msra.mxu0 0.0
    %132 = vmatprep.subr.mxu0 0.0
    %133 = vmatpush1.msra.mxu0 0.0
    %134 = vmatprep.subr.mxu0 0.0
    %135 = vmatpush1.msra.mxu0 0.0
    %136 = vmatprep.subr.mxu0 0.0
    %137 = vmatpush1.msra.mxu0 0.0
    %138 = vmatprep.mubr.f32.mxu0 0.0
    %139 = vmatmul.mubr.f32.gmra.mrb[0].mxu0 %v63
    %v140 = vpop.f32.mrb[0].mxu0
    %v141 = vadd.f32 %v44, %v140
    %v142 = vpop.f32.mrb[0].mxu0
    %143 = vmatprep.mubr.f32.mxu0 0.0
    %144 = vmatmul.mubr.f32.gmra.mrb[0].mxu0 %v66
    %v145 = vpop.f32.mrb[0].mxu0
    %v146 = vadd.f32 %v49, %v145
    %v147 = vpop.f32.mrb[0].mxu0
    %148 = vmatprep.mubr.f32.mxu0 0.0
    %149 = vmatmul.mubr.f32.gmra.mrb[0].mxu0 %v69
    %v150 = vpop.f32.mrb[0].mxu0
    %v151 = vadd.f32 %v54, %v150
    %v152 = vpop.f32.mrb[0].mxu0
    %153 = vmatprep.mubr.f32.mxu0 0.0
    %154 = vmatmul.mubr.f32.gmra.mrb[0].mxu0 %v72
    %v155 = vpop.f32.mrb[0].mxu0
    %v156 = vadd.f32 %v59, %v155
    %v157 = vpop.f32.mrb[0].mxu0
    %158 = vdwg.mxu0
    %v159 = vmax.f32 %v141, 0.0
    %v160 = vmax.f32 %v146, 0.0
    %v161 = vmax.f32 %v151, 0.0
    %v162 = vmax.f32 %v156, 0.0
    %s163 = scalar_lea.vmem %s1, 32
    %v164 = vld [vmem:[%s163] sm:$0xff]
    %v165 = vld [vmem:[%s163 + $0x8] sm:$0xff]
    %v166 = vld [vmem:[%s163 + $0x10] sm:$0xff]
    %v167 = vld [vmem:[%s163 + $0x18] sm:$0xff]
    %s168 = scalar_lea.vmem %s2, 32
    %v169 = vld [vmem:[%s168] sm:$0xff]
    %v170 = vld [vmem:[%s168 + $0x8] sm:$0xff]
    %v171 = vld [vmem:[%s168 + $0x10] sm:$0xff]
    %v172 = vld [vmem:[%s168 + $0x18] sm:$0xff]
    %174 = vset.pattern.permute.xlu0 0
    %175 = vperm.xlu0 %174, %v169
    %v176 = vpop.permute.xlu0 %175
    %179 = vset.pattern.permute.xlu0 0
    %180 = vperm.xlu0 %179, %v170
    %v181 = vpop.permute.xlu0 %180
    %184 = vset.pattern.permute.xlu0 0
    %185 = vperm.xlu0 %184, %v171
    %v186 = vpop.permute.xlu0 %185
    %189 = vset.pattern.permute.xlu0 0
    %190 = vperm.xlu0 %189, %v172
    %v191 = vpop.permute.xlu0 %190
    %v194 = vsel %vm61, %v164, 0
    %v197 = vsel %vm61, %v165, 0
    %v200 = vsel %vm61, %v166, 0
    %v203 = vsel %vm61, %v167, 0
    %205 = vmatprep.subr.mxu0 0.0
    %206 = vmatpush1.msra.mxu0 %v159
    %207 = vmatprep.subr.mxu0 0.0
    %208 = vmatpush1.msra.mxu0 %v160
    %209 = vmatprep.subr.mxu0 0.0
    %210 = vmatpush1.msra.mxu0 %v161
    %211 = vmatprep.subr.mxu0 0.0
    %212 = vmatpush1.msra.mxu0 %v162
    %213 = vmatprep.subr.mxu0 0.0
    %214 = vmatpush1.msra.mxu0 0.0
    %215 = vmatprep.subr.mxu0 0.0
    %216 = vmatpush1.msra.mxu0 0.0
    %217 = vmatprep.subr.mxu0 0.0
    %218 = vmatpush1.msra.mxu0 0.0
    %219 = vmatprep.subr.mxu0 0.0
    %220 = vmatpush1.msra.mxu0 0.0
    %221 = vmatprep.subr.mxu0 0.0
    %222 = vmatpush1.msra.mxu0 0.0
    %223 = vmatprep.subr.mxu0 0.0
    %224 = vmatpush1.msra.mxu0 0.0
    %225 = vmatprep.subr.mxu0 0.0
    %226 = vmatpush1.msra.mxu0 0.0
    %227 = vmatprep.subr.mxu0 0.0
    %228 = vmatpush1.msra.mxu0 0.0
    %229 = vmatprep.subr.mxu0 0.0
    %230 = vmatpush1.msra.mxu0 0.0
    %231 = vmatprep.subr.mxu0 0.0
    %232 = vmatpush1.msra.mxu0 0.0
    %233 = vmatprep.subr.mxu0 0.0
    %234 = vmatpush1.msra.mxu0 0.0
    %235 = vmatprep.subr.mxu0 0.0
    %236 = vmatpush1.msra.mxu0 0.0
    %237 = vmatprep.subr.mxu0 0.0
    %238 = vmatpush1.msra.mxu0 0.0
    %239 = vmatprep.subr.mxu0 0.0
    %240 = vmatpush1.msra.mxu0 0.0
    %241 = vmatprep.subr.mxu0 0.0
    %242 = vmatpush1.msra.mxu0 0.0
    %243 = vmatprep.subr.mxu0 0.0
    %244 = vmatpush1.msra.mxu0 0.0
    %245 = vmatprep.subr.mxu0 0.0
    %246 = vmatpush1.msra.mxu0 0.0
    %247 = vmatprep.subr.mxu0 0.0
    %248 = vmatpush1.msra.mxu0 0.0
    %249 = vmatprep.subr.mxu0 0.0
    %250 = vmatpush1.msra.mxu0 0.0
    %251 = vmatprep.subr.mxu0 0.0
    %252 = vmatpush1.msra.mxu0 0.0
    %253 = vmatprep.subr.mxu0 0.0
    %254 = vmatpush1.msra.mxu0 0.0
    %255 = vmatprep.subr.mxu0 0.0
    %256 = vmatpush1.msra.mxu0 0.0
    %257 = vmatprep.subr.mxu0 0.0
    %258 = vmatpush1.msra.mxu0 0.0
    %259 = vmatprep.subr.mxu0 0.0
    %260 = vmatpush1.msra.mxu0 0.0
    %261 = vmatprep.subr.mxu0 0.0
    %262 = vmatpush1.msra.mxu0 0.0
    %263 = vmatprep.subr.mxu0 0.0
    %264 = vmatpush1.msra.mxu0 0.0
    %265 = vmatprep.subr.mxu0 0.0
    %266 = vmatpush1.msra.mxu0 0.0
    %267 = vmatprep.subr.mxu0 0.0
    %268 = vmatpush1.msra.mxu0 0.0
    %269 = vmatprep.mubr.f32.mxu0 0.0
    %270 = vmatmul.mubr.f32.gmra.mrb[0].mxu0 %v194
    %v271 = vpop.f32.mrb[0].mxu0
    %v272 = vadd.f32 %v176, %v271
    %v273 = vpop.f32.mrb[0].mxu0
    %274 = vmatprep.mubr.f32.mxu0 0.0
    %275 = vmatmul.mubr.f32.gmra.mrb[0].mxu0 %v197
    %v276 = vpop.f32.mrb[0].mxu0
    %v277 = vadd.f32 %v181, %v276
    %v278 = vpop.f32.mrb[0].mxu0
    %279 = vmatprep.mubr.f32.mxu0 0.0
    %280 = vmatmul.mubr.f32.gmra.mrb[0].mxu0 %v200
    %v281 = vpop.f32.mrb[0].mxu0
    %v282 = vadd.f32 %v186, %v281
    %v283 = vpop.f32.mrb[0].mxu0
    %284 = vmatprep.mubr.f32.mxu0 0.0
    %285 = vmatmul.mubr.f32.gmra.mrb[0].mxu0 %v203
    %v286 = vpop.f32.mrb[0].mxu0
    %v287 = vadd.f32 %v191, %v286
    %v288 = vpop.f32.mrb[0].mxu0
    %289 = vdwg.mxu0
    %v290 = vmax.f32 %v272, 0.0
    %v291 = vmax.f32 %v277, 0.0
    %v292 = vmax.f32 %v282, 0.0
    %v293 = vmax.f32 %v287, 0.0
    %s294 = scalar_lea.vmem %s1, 64
    %v295 = vld [vmem:[%s294] sm:$0xff]
    %v296 = vld [vmem:[%s294 + $0x8] sm:$0xff]
    %v297 = vld [vmem:[%s294 + $0x10] sm:$0xff]
    %v298 = vld [vmem:[%s294 + $0x18] sm:$0xff]
    %s299 = scalar_lea.vmem %s2, 64
    %v300 = vld [vmem:[%s299] sm:$0xff]
    %v301 = vld [vmem:[%s299 + $0x8] sm:$0xff]
    %v302 = vld [vmem:[%s299 + $0x10] sm:$0xff]
    %v303 = vld [vmem:[%s299 + $0x18] sm:$0xff]
    %305 = vset.pattern.permute.xlu0 0
    %306 = vperm.xlu0 %305, %v300
    %v307 = vpop.permute.xlu0 %306
    %310 = vset.pattern.permute.xlu0 0
    %311 = vperm.xlu0 %310, %v301
    %v312 = vpop.permute.xlu0 %311
    %315 = vset.pattern.permute.xlu0 0
    %316 = vperm.xlu0 %315, %v302
    %v317 = vpop.permute.xlu0 %316
    %320 = vset.pattern.permute.xlu0 0
    %321 = vperm.xlu0 %320, %v303
    %v322 = vpop.permute.xlu0 %321
    %v325 = vsel %vm61, %v295, 0
    %v328 = vsel %vm61, %v296, 0
    %v331 = vsel %vm61, %v297, 0
    %v334 = vsel %vm61, %v298, 0
    %336 = vmatprep.subr.mxu0 0.0
    %337 = vmatpush1.msra.mxu0 %v290
    %338 = vmatprep.subr.mxu0 0.0
    %339 = vmatpush1.msra.mxu0 %v291
    %340 = vmatprep.subr.mxu0 0.0
    %341 = vmatpush1.msra.mxu0 %v292
    %342 = vmatprep.subr.mxu0 0.0
    %343 = vmatpush1.msra.mxu0 %v293
    %344 = vmatprep.subr.mxu0 0.0
    %345 = vmatpush1.msra.mxu0 0.0
    %346 = vmatprep.subr.mxu0 0.0
    %347 = vmatpush1.msra.mxu0 0.0
    %348 = vmatprep.subr.mxu0 0.0
    %349 = vmatpush1.msra.mxu0 0.0
    %350 = vmatprep.subr.mxu0 0.0
    %351 = vmatpush1.msra.mxu0 0.0
    %352 = vmatprep.subr.mxu0 0.0
    %353 = vmatpush1.msra.mxu0 0.0
    %354 = vmatprep.subr.mxu0 0.0
    %355 = vmatpush1.msra.mxu0 0.0
    %356 = vmatprep.subr.mxu0 0.0
    %357 = vmatpush1.msra.mxu0 0.0
    %358 = vmatprep.subr.mxu0 0.0
    %359 = vmatpush1.msra.mxu0 0.0
    %360 = vmatprep.subr.mxu0 0.0
    %361 = vmatpush1.msra.mxu0 0.0
    %362 = vmatprep.subr.mxu0 0.0
    %363 = vmatpush1.msra.mxu0 0.0
    %364 = vmatprep.subr.mxu0 0.0
    %365 = vmatpush1.msra.mxu0 0.0
    %366 = vmatprep.subr.mxu0 0.0
    %367 = vmatpush1.msra.mxu0 0.0
    %368 = vmatprep.subr.mxu0 0.0
    %369 = vmatpush1.msra.mxu0 0.0
    %370 = vmatprep.subr.mxu0 0.0
    %371 = vmatpush1.msra.mxu0 0.0
    %372 = vmatprep.subr.mxu0 0.0
    %373 = vmatpush1.msra.mxu0 0.0
    %374 = vmatprep.subr.mxu0 0.0
    %375 = vmatpush1.msra.mxu0 0.0
    %376 = vmatprep.subr.mxu0 0.0
    %377 = vmatpush1.msra.mxu0 0.0
    %378 = vmatprep.subr.mxu0 0.0
    %379 = vmatpush1.msra.mxu0 0.0
    %380 = vmatprep.subr.mxu0 0.0
    %381 = vmatpush1.msra.mxu0 0.0
    %382 = vmatprep.subr.mxu0 0.0
    %383 = vmatpush1.msra.mxu0 0.0
    %384 = vmatprep.subr.mxu0 0.0
    %385 = vmatpush1.msra.mxu0 0.0
    %386 = vmatprep.subr.mxu0 0.0
    %387 = vmatpush1.msra.mxu0 0.0
    %388 = vmatprep.subr.mxu0 0.0
    %389 = vmatpush1.msra.mxu0 0.0
    %390 = vmatprep.subr.mxu0 0.0
    %391 = vmatpush1.msra.mxu0 0.0
    %392 = vmatprep.subr.mxu0 0.0
    %393 = vmatpush1.msra.mxu0 0.0
    %394 = vmatprep.subr.mxu0 0.0
    %395 = vmatpush1.msra.mxu0 0.0
    %396 = vmatprep.subr.mxu0 0.0
    %397 = vmatpush1.msra.mxu0 0.0
    %398 = vmatprep.subr.mxu0 0.0
    %399 = vmatpush1.msra.mxu0 0.0
    %400 = vmatprep.mubr.f32.mxu0 0.0
    %401 = vmatmul.mubr.f32.gmra.mrb[0].mxu0 %v325
    %v402 = vpop.f32.mrb[0].mxu0
    %v403 = vadd.f32 %v307, %v402
    %v404 = vpop.f32.mrb[0].mxu0
    %405 = vmatprep.mubr.f32.mxu0 0.0
    %406 = vmatmul.mubr.f32.gmra.mrb[0].mxu0 %v328
    %v407 = vpop.f32.mrb[0].mxu0
    %v408 = vadd.f32 %v312, %v407
    %v409 = vpop.f32.mrb[0].mxu0
    %410 = vmatprep.mubr.f32.mxu0 0.0
    %411 = vmatmul.mubr.f32.gmra.mrb[0].mxu0 %v331
    %v412 = vpop.f32.mrb[0].mxu0
    %v413 = vadd.f32 %v317, %v412
    %v414 = vpop.f32.mrb[0].mxu0
    %415 = vmatprep.mubr.f32.mxu0 0.0
    %416 = vmatmul.mubr.f32.gmra.mrb[0].mxu0 %v334
    %v417 = vpop.f32.mrb[0].mxu0
    %v418 = vadd.f32 %v322, %v417
    %v419 = vpop.f32.mrb[0].mxu0
    %420 = vdwg.mxu0
    %421 = vst [vmem:[#allocation5] sm:$0xff] %v403
    %422 = vst [vmem:[#allocation5 + $0x8] sm:$0xff] %v408
    %423 = vst [vmem:[#allocation5 + $0x10] sm:$0xff] %v413
    %424 = vst [vmem:[#allocation5 + $0x18] sm:$0xff] %v418
    // Predicated region
    $region18: #{tpu_custom_call.1} parent=1 // pred_check
      _
    $region19: #{tpu_custom_call.1} parent=1 // pred_check_branch
      %426 = sbr.rel (0) target = $region21
    $region20: #{tpu_custom_call.1} parent=1 // pred_region
      %s428 = ssub.s32 512, 512
      %429 = vsyncadd [#allocation4], %s428
      %s430 = sshll.u32 [#allocation5], 4
      %s431 = int_to_ptr.vmem [resolvable:$true] %s430
      %436 = dma.vmem_to_hbm [thread:$0]  %s431, 512, %s3, [#allocation4], 128, 128, 8
    $region21: #{tpu_custom_call.1} parent=1 // pred_fallthru
      _
    // Predicated region
    $region22: #{tpu_custom_call.1} parent=1 // pred_check
      _
    $region23: #{tpu_custom_call.1} parent=1 // pred_check_branch
      %438 = sbr.rel (0) target = $region25
    $region24: #{tpu_custom_call.1} parent=1 // pred_region
      %439 = dma.done [#allocation4], 512
    $region25: #{tpu_custom_call.1} parent=1 // pred_fallthru
      _
    %440 = vsyncpa [#allocation3], 1
    %441 = vsyncpa [#allocation4], 1

</llo_original>
